<compile_context>
chip_gen: v7x
topology: tpu7x:2x2x1
jax: 0.10.0
libtpu: 0.0.40
codegen_flags: <defaults>
</compile_context>

<pallas_src>
import functools

import jax
import jax.numpy as jnp
from jax.experimental import pallas as pl
from jax.experimental.pallas import tpu as pltpu


def net6_kernel(xT_ref,
                w1_ref, b1_ref,
                w2_ref, b2_ref,
                w3_ref, b3_ref,
                w4_ref, b4_ref,
                oT_ref):
    """Fused 4-layer MLP on a [*, block_b] (batch-on-lane) tile.

    Matmul inputs are bf16 (full-rate MXU); accumulation, bias add and ReLU
    are f32.  Dropout layers are eval-mode identities.
    """
    xT = xT_ref[...]                                                   # [F, tb] bf16

    # fc1: Linear(n_feature, 160) -> Dropout (identity, eval) -> ReLU
    h = jnp.dot(w1_ref[...], xT, preferred_element_type=jnp.float32)  # [160, tb] f32
    h = jnp.maximum(h + b1_ref[...], 0.0)

    # fc2: Linear(160, 100) -> Dropout (identity, eval) -> ReLU
    h = jnp.dot(w2_ref[...], h.astype(w2_ref.dtype),
                preferred_element_type=jnp.float32)                    # [100, tb]
    h = jnp.maximum(h + b2_ref[...], 0.0)

    # fc3: Linear(100, 20) -> Dropout (identity, eval) -> ReLU
    h = jnp.dot(w3_ref[...], h.astype(w3_ref.dtype),
                preferred_element_type=jnp.float32)                    # [20, tb]
    h = jnp.maximum(h + b3_ref[...], 0.0)

    # fc4: Linear(20, n_output)
    o = jnp.dot(w4_ref[...], h.astype(w4_ref.dtype),
                preferred_element_type=jnp.float32) + b4_ref[...]      # [O, tb]
    oT_ref[...] = o.astype(oT_ref.dtype)


def _choose_block_b(batch, requested):
    """Pick a lane-dense batch tile.

    Small batches run in a single full-extent block; larger batches use a
    multiple-of-128 tile (lane-dense stores) with at least 2 grid steps so
    v7x's two TensorCores both get work.
    """
    if batch <= 256:
        return batch
    tb = min(requested, batch // 2)
    return max(128, (tb // 128) * 128)


@functools.partial(jax.jit, static_argnames=("block_b",))
def net6_forward(x, params, block_b=512):
    """x: [B, n_feature] float32. params: ((W,b),...) with W in PyTorch [out, in]."""
    (w1, b1), (w2, b2), (w3, b3), (w4, b4) = params
    B, n_feature = x.shape
    n_output = w4.shape[0]

    tb = _choose_block_b(B, block_b)
    grid = (pl.cdiv(B, tb),)

    # Batch-on-lane layout: kernel computes o^T = W @ x^T.
    xT = x.T.astype(jnp.bfloat16)                                  # [F, B] bf16
    ws = [w.astype(jnp.bfloat16) for w in (w1, w2, w3, w4)]        # [out, in] bf16
    bs = [b.reshape(-1, 1).astype(jnp.float32) for b in (b1, b2, b3, b4)]

    def resident(shape):
        # Same full block every grid step -> kept resident in VMEM (no re-DMA).
        return pl.BlockSpec(shape, lambda i: (0, 0))

    in_specs = [pl.BlockSpec((n_feature, tb), lambda i: (0, i))]   # x^T, tiled over batch lanes
    for w, b in zip(ws, bs):
        in_specs.append(resident(w.shape))
        in_specs.append(resident(b.shape))
    out_specs = pl.BlockSpec((n_output, tb), lambda i: (0, i))

    flops = 2 * B * (n_feature * 160 + 160 * 100 + 100 * 20 + 20 * n_output)
    bytes_accessed = (xT.size * 2                      # bf16 activations in
                      + B * n_output * 4               # f32 output
                      + sum(w.size * 2 for w in ws)    # bf16 weights
                      + sum(b.size * 4 for b in bs))   # f32 biases

    oT = pl.pallas_call(
        net6_kernel,
        out_shape=jax.ShapeDtypeStruct((n_output, B), jnp.float32),
        grid_spec=pl.GridSpec(
            grid=grid,
            in_specs=in_specs,
            out_specs=out_specs,
        ),
        compiler_params=pltpu.CompilerParams(
            dimension_semantics=("parallel",)),
        cost_estimate=pl.CostEstimate(
            flops=flops, transcendentals=0, bytes_accessed=bytes_accessed),
    )(xT, ws[0], bs[0], ws[1], bs[1], ws[2], bs[2], ws[3], bs[3])

    return oT.T                                                    # [B, n_output] f32


def init_params(key, n_feature, n_output):
    """Deterministic synthetic init mirroring Net_6's Linear layers (PyTorch [out, in])."""
    dims = [(n_feature, 160), (160, 100), (100, 20), (20, n_output)]
    params = []
    for fan_in, fan_out in dims:
        key, kw, kb = jax.random.split(key, 3)
        bound = 1.0 / (fan_in ** 0.5)
        w = jax.random.uniform(kw, (fan_out, fan_in), jnp.float32, -bound, bound)
        b = jax.random.uniform(kb, (fan_out,), jnp.float32, -bound, bound)
        params.append((w, b))
    return tuple(params)


def net6_reference_bf16(x, params):
    """Pure-JAX reference with the same numerics as the kernel (bf16 MXU inputs, f32 accum)."""
    h = x
    for i, (w, b) in enumerate(params):
        h = jnp.dot(h.astype(jnp.bfloat16), w.T.astype(jnp.bfloat16),
                    preferred_element_type=jnp.float32) + b
        if i < len(params) - 1:
            h = jnp.maximum(h, 0.0)
    return h


def net6_reference_f32(x, params):
    """Pure-f32 eval-mode reference of the original module."""
    h = x
    for i, (w, b) in enumerate(params):
        h = h @ w.T + b
        if i < len(params) - 1:
            h = jnp.maximum(h, 0.0)
    return h


if __name__ == "__main__":
    key = jax.random.PRNGKey(0)
    n_feature, n_output, batch = 32, 4, 8

    key, kx = jax.random.split(key)
    x = jax.random.normal(kx, (batch, n_feature), jnp.float32)
    params = init_params(key, n_feature, n_output)

    out = net6_forward(x, params)
    out = jax.block_until_ready(out)
    assert out.shape == (batch, n_output)

    ref_bf16 = net6_reference_bf16(x, params)
    assert jnp.allclose(out, ref_bf16, atol=2e-3, rtol=2e-3), "mismatch vs bf16 reference"

    ref_f32 = net6_reference_f32(x, params)
    assert jnp.allclose(out, ref_f32, atol=1e-1, rtol=1e-1), "mismatch vs f32 reference"

    print("KERNEL_OK")
</pallas_src>

<mosaic_0001>
module attributes {stable_mosaic.version = 11 : i64} {
  func.func @net6_kernel(%arg0: i32, %arg1: memref<32x8xbf16, #tpu.memory_space<vmem>>, %arg2: memref<160x32xbf16, #tpu.memory_space<vmem>>, %arg3: memref<160x1xf32, #tpu.memory_space<vmem>>, %arg4: memref<100x160xbf16, #tpu.memory_space<vmem>>, %arg5: memref<100x1xf32, #tpu.memory_space<vmem>>, %arg6: memref<20x100xbf16, #tpu.memory_space<vmem>>, %arg7: memref<20x1xf32, #tpu.memory_space<vmem>>, %arg8: memref<4x20xbf16, #tpu.memory_space<vmem>>, %arg9: memref<4x1xf32, #tpu.memory_space<vmem>>, %arg10: memref<4x8xf32, #tpu.memory_space<vmem>>) attributes {dimension_semantics = [#tpu.dimension_semantics<parallel>], iteration_bounds = array<i64: 1>, scalar_prefetch = 0 : i64, scratch_operands = 0 : i64, tpu.core_type = #tpu.core_type<tc>, window_params = [{transform_indices = @transform_0, window_bounds = array<i64: 32, 8>}, {pipeline_mode = #tpu.pipeline_mode<synchronous>, transform_indices = @transform_1, window_bounds = array<i64: 160, 32>}, {pipeline_mode = #tpu.pipeline_mode<synchronous>, transform_indices = @transform_2, window_bounds = array<i64: 160, 1>}, {pipeline_mode = #tpu.pipeline_mode<synchronous>, transform_indices = @transform_3, window_bounds = array<i64: 100, 160>}, {pipeline_mode = #tpu.pipeline_mode<synchronous>, transform_indices = @transform_4, window_bounds = array<i64: 100, 1>}, {pipeline_mode = #tpu.pipeline_mode<synchronous>, transform_indices = @transform_5, window_bounds = array<i64: 20, 100>}, {pipeline_mode = #tpu.pipeline_mode<synchronous>, transform_indices = @transform_6, window_bounds = array<i64: 20, 1>}, {pipeline_mode = #tpu.pipeline_mode<synchronous>, transform_indices = @transform_7, window_bounds = array<i64: 4, 20>}, {pipeline_mode = #tpu.pipeline_mode<synchronous>, transform_indices = @transform_8, window_bounds = array<i64: 4, 1>}, {transform_indices = @transform_9, window_bounds = array<i64: 4, 8>}]} {
    %c0 = arith.constant 0 : index
    %c0_0 = arith.constant 0 : index
    %0 = vector.load %arg1[%c0, %c0_0] : memref<32x8xbf16, #tpu.memory_space<vmem>>, vector<32x8xbf16>
    %c0_1 = arith.constant 0 : index
    %c0_2 = arith.constant 0 : index
    %1 = vector.load %arg2[%c0_1, %c0_2] : memref<160x32xbf16, #tpu.memory_space<vmem>>, vector<160x32xbf16>
    %cst = arith.constant dense<0.000000e+00> : vector<160x8xf32>
    %2 = tpu.matmul %1, %0, %cst {dimension_numbers = #tpu.dot_dimension_numbers<[1], [0], [0], [1], [0, 0, 1, 1], [], []>} : vector<160x32xbf16>, vector<32x8xbf16>, vector<160x8xf32> -> vector<160x8xf32>
    %c0_3 = arith.constant 0 : index
    %c0_4 = arith.constant 0 : index
    %3 = vector.load %arg3[%c0_3, %c0_4] : memref<160x1xf32, #tpu.memory_space<vmem>>, vector<160x1xf32>
    %4 = vector.broadcast %3 : vector<160x1xf32> to vector<160x8xf32>
    %5 = arith.addf %2, %4 : vector<160x8xf32>
    %cst_5 = arith.constant 0.000000e+00 : f32
    %6 = vector.broadcast %cst_5 : f32 to vector<160x8xf32>
    %7 = arith.maximumf %5, %6 : vector<160x8xf32>
    %c0_6 = arith.constant 0 : index
    %c0_7 = arith.constant 0 : index
    %8 = vector.load %arg4[%c0_6, %c0_7] : memref<100x160xbf16, #tpu.memory_space<vmem>>, vector<100x160xbf16>
    %9 = arith.truncf %7 : vector<160x8xf32> to vector<160x8xbf16>
    %cst_8 = arith.constant dense<0.000000e+00> : vector<100x8xf32>
    %10 = tpu.matmul %8, %9, %cst_8 {dimension_numbers = #tpu.dot_dimension_numbers<[1], [0], [0], [1], [0, 0, 1, 1], [], []>} : vector<100x160xbf16>, vector<160x8xbf16>, vector<100x8xf32> -> vector<100x8xf32>
    %c0_9 = arith.constant 0 : index
    %c0_10 = arith.constant 0 : index
    %11 = vector.load %arg5[%c0_9, %c0_10] : memref<100x1xf32, #tpu.memory_space<vmem>>, vector<100x1xf32>
    %12 = vector.broadcast %11 : vector<100x1xf32> to vector<100x8xf32>
    %13 = arith.addf %10, %12 : vector<100x8xf32>
    %cst_11 = arith.constant 0.000000e+00 : f32
    %14 = vector.broadcast %cst_11 : f32 to vector<100x8xf32>
    %15 = arith.maximumf %13, %14 : vector<100x8xf32>
    %c0_12 = arith.constant 0 : index
    %c0_13 = arith.constant 0 : index
    %16 = vector.load %arg6[%c0_12, %c0_13] : memref<20x100xbf16, #tpu.memory_space<vmem>>, vector<20x100xbf16>
    %17 = arith.truncf %15 : vector<100x8xf32> to vector<100x8xbf16>
    %cst_14 = arith.constant dense<0.000000e+00> : vector<20x8xf32>
    %18 = tpu.matmul %16, %17, %cst_14 {dimension_numbers = #tpu.dot_dimension_numbers<[1], [0], [0], [1], [0, 0, 1, 1], [], []>} : vector<20x100xbf16>, vector<100x8xbf16>, vector<20x8xf32> -> vector<20x8xf32>
    %c0_15 = arith.constant 0 : index
    %c0_16 = arith.constant 0 : index
    %19 = vector.load %arg7[%c0_15, %c0_16] : memref<20x1xf32, #tpu.memory_space<vmem>>, vector<20x1xf32>
    %20 = vector.broadcast %19 : vector<20x1xf32> to vector<20x8xf32>
    %21 = arith.addf %18, %20 : vector<20x8xf32>
    %cst_17 = arith.constant 0.000000e+00 : f32
    %22 = vector.broadcast %cst_17 : f32 to vector<20x8xf32>
    %23 = arith.maximumf %21, %22 : vector<20x8xf32>
    %c0_18 = arith.constant 0 : index
    %c0_19 = arith.constant 0 : index
    %24 = vector.load %arg8[%c0_18, %c0_19] : memref<4x20xbf16, #tpu.memory_space<vmem>>, vector<4x20xbf16>
    %25 = arith.truncf %23 : vector<20x8xf32> to vector<20x8xbf16>
    %cst_20 = arith.constant dense<0.000000e+00> : vector<4x8xf32>
    %26 = tpu.matmul %24, %25, %cst_20 {dimension_numbers = #tpu.dot_dimension_numbers<[1], [0], [0], [1], [0, 0, 1, 1], [], []>} : vector<4x20xbf16>, vector<20x8xbf16>, vector<4x8xf32> -> vector<4x8xf32>
    %c0_21 = arith.constant 0 : index
    %c0_22 = arith.constant 0 : index
    %27 = vector.load %arg9[%c0_21, %c0_22] : memref<4x1xf32, #tpu.memory_space<vmem>>, vector<4x1xf32>
    %28 = vector.broadcast %27 : vector<4x1xf32> to vector<4x8xf32>
    %29 = arith.addf %26, %28 : vector<4x8xf32>
    %c0_23 = arith.constant 0 : index
    %c0_24 = arith.constant 0 : index
    %30 = vector.load %arg10[%c0_23, %c0_24] : memref<4x8xf32, #tpu.memory_space<vmem>>, vector<4x8xf32>
    tpu.vector_store %arg10[%c0_23, %c0_24], %29 {strides = array<i32>} : memref<4x8xf32, #tpu.memory_space<vmem>>, vector<4x8xf32>,
    return
  }
  func.func @transform_0(%arg0: i32) -> (i32, i32) {
    %c0_i32 = arith.constant 0 : i32
    %c0_i32_0 = arith.constant 0 : i32
    return %c0_i32, %arg0 : i32, i32
  }
  func.func @transform_1(%arg0: i32) -> (i32, i32) {
    %c0_i32 = arith.constant 0 : i32
    %c0_i32_0 = arith.constant 0 : i32
    %c0_i32_1 = arith.constant 0 : i32
    return %c0_i32, %c0_i32_0 : i32, i32
  }
  func.func @transform_2(%arg0: i32) -> (i32, i32) {
    %c0_i32 = arith.constant 0 : i32
    %c0_i32_0 = arith.constant 0 : i32
    %c0_i32_1 = arith.constant 0 : i32
    return %c0_i32, %c0_i32_0 : i32, i32
  }
  func.func @transform_3(%arg0: i32) -> (i32, i32) {
    %c0_i32 = arith.constant 0 : i32
    %c0_i32_0 = arith.constant 0 : i32
    %c0_i32_1 = arith.constant 0 : i32
    return %c0_i32, %c0_i32_0 : i32, i32
  }
  func.func @transform_4(%arg0: i32) -> (i32, i32) {
    %c0_i32 = arith.constant 0 : i32
    %c0_i32_0 = arith.constant 0 : i32
    %c0_i32_1 = arith.constant 0 : i32
    return %c0_i32, %c0_i32_0 : i32, i32
  }
  func.func @transform_5(%arg0: i32) -> (i32, i32) {
    %c0_i32 = arith.constant 0 : i32
    %c0_i32_0 = arith.constant 0 : i32
    %c0_i32_1 = arith.constant 0 : i32
    return %c0_i32, %c0_i32_0 : i32, i32
  }
  func.func @transform_6(%arg0: i32) -> (i32, i32) {
    %c0_i32 = arith.constant 0 : i32
    %c0_i32_0 = arith.constant 0 : i32
    %c0_i32_1 = arith.constant 0 : i32
    return %c0_i32, %c0_i32_0 : i32, i32
  }
  func.func @transform_7(%arg0: i32) -> (i32, i32) {
    %c0_i32 = arith.constant 0 : i32
    %c0_i32_0 = arith.constant 0 : i32
    %c0_i32_1 = arith.constant 0 : i32
    return %c0_i32, %c0_i32_0 : i32, i32
  }
  func.func @transform_8(%arg0: i32) -> (i32, i32) {
    %c0_i32 = arith.constant 0 : i32
    %c0_i32_0 = arith.constant 0 : i32
    %c0_i32_1 = arith.constant 0 : i32
    return %c0_i32, %c0_i32_0 : i32, i32
  }
  func.func @transform_9(%arg0: i32) -> (i32, i32) {
    %c0_i32 = arith.constant 0 : i32
    %c0_i32_0 = arith.constant 0 : i32
    return %c0_i32, %arg0 : i32, i32
  }
}

</mosaic_0001>

<llo_original>
// kernel: net6_forward.1
$region0: #{net6_forward.1}
  #allocation0 [shape = 'u32[]', space=smem, size = 0x4, offset = 0x4, fixed_abs, tag = 'smem constant byte address 0x4 - core index']
  #allocation1 [shape = 'u32[144,128]{1,0:T(1,128)}', space=vmem, size = 0x12000, scoped, tag = 'internal scratch']
  %s0 = inlined_call_operand.vmem [shape: bf16[32,8], index: 0, kind: input, shape index: {}]
  %s1 = inlined_call_operand.vmem [shape: bf16[160,32], index: 1, kind: input, shape index: {}]
  %s2 = inlined_call_operand.vmem [shape: f32[160,1], index: 2, kind: input, shape index: {}]
  %s3 = inlined_call_operand.vmem [shape: bf16[100,160], index: 3, kind: input, shape index: {}]
  %s4 = inlined_call_operand.vmem [shape: f32[100,1], index: 4, kind: input, shape index: {}]
  %s5 = inlined_call_operand.vmem [shape: bf16[20,100], index: 5, kind: input, shape index: {}]
  %s6 = inlined_call_operand.vmem [shape: f32[20,1], index: 6, kind: input, shape index: {}]
  %s7 = inlined_call_operand.vmem [shape: bf16[4,20], index: 7, kind: input, shape index: {}]
  %s8 = inlined_call_operand.vmem [shape: f32[4,1], index: 8, kind: input, shape index: {}]
  %s9 = inlined_call_operand.hbm [shape: f32[4,8], index: 9, kind: output, shape index: {}]
  %s10 = sld [smem:[#allocation0]]
  $region46: #{net6_forward.1} parent=0
    _
  %s12 = ssub.s32 1, %s10
  %s13 = scalar_select 0, %s12, %s10
  $region1: #{net6_forward.1} parent=0
    #allocation2 [shape = 'u8[2048]{0}', space=vmem, size = 0x800, scoped, tag = 'output window, operand 0, single buffered']
    #allocation3 [shape = 's32[1]{0}', space=sflag, size = 0x4, scoped, tag = 'scoped memory for net6_forward.1']
    %14 = vsyncpa [#allocation3], 0
    // Predicated region
    $region2: #{net6_forward.1} parent=1 // pred_check
      _
    $region3: #{net6_forward.1} parent=1 // pred_check_branch
      %16 = sbr.rel (0) target = $region5
    $region4: #{net6_forward.1} parent=1 // pred_region
      _
    $region5: #{net6_forward.1} parent=1 // pred_fallthru
      _
    // Predicated region
    $region6: #{net6_forward.1} parent=1 // pred_check
      _
    $region7: #{net6_forward.1} parent=1 // pred_check_branch
      %18 = sbr.rel (0) target = $region9
    $region8: #{net6_forward.1} parent=1 // pred_region
      _
    $region9: #{net6_forward.1} parent=1 // pred_fallthru
      _
    // Predicated region
    $region10: #{net6_forward.1} parent=1 // pred_check
      _
    $region11: #{net6_forward.1} parent=1 // pred_check_branch
      %20 = sbr.rel (0) target = $region13
    $region12: #{net6_forward.1} parent=1 // pred_region
      _
    $region13: #{net6_forward.1} parent=1 // pred_fallthru
      _
    // Predicated region
    $region14: #{net6_forward.1} parent=1 // pred_check
      _
    $region15: #{net6_forward.1} parent=1 // pred_check_branch
      %22 = sbr.rel (0) target = $region17
    $region16: #{net6_forward.1} parent=1 // pred_region
      _
    $region17: #{net6_forward.1} parent=1 // pred_fallthru
      _
    // Predicated region
    $region18: #{net6_forward.1} parent=1 // pred_check
      _
    $region19: #{net6_forward.1} parent=1 // pred_check_branch
      %24 = sbr.rel (0) target = $region21
    $region20: #{net6_forward.1} parent=1 // pred_region
      _
    $region21: #{net6_forward.1} parent=1 // pred_fallthru
      _
    // Predicated region
    $region22: #{net6_forward.1} parent=1 // pred_check
      _
    $region23: #{net6_forward.1} parent=1 // pred_check_branch
      %26 = sbr.rel (0) target = $region25
    $region24: #{net6_forward.1} parent=1 // pred_region
      _
    $region25: #{net6_forward.1} parent=1 // pred_fallthru
      _
    // Predicated region
    $region26: #{net6_forward.1} parent=1 // pred_check
      _
    $region27: #{net6_forward.1} parent=1 // pred_check_branch
      %28 = sbr.rel (0) target = $region29
    $region28: #{net6_forward.1} parent=1 // pred_region
      _
    $region29: #{net6_forward.1} parent=1 // pred_fallthru
      _
    // Predicated region
    $region30: #{net6_forward.1} parent=1 // pred_check
      _
    $region31: #{net6_forward.1} parent=1 // pred_check_branch
      %30 = sbr.rel (0) target = $region33
    $region32: #{net6_forward.1} parent=1 // pred_region
      _
    $region33: #{net6_forward.1} parent=1 // pred_fallthru
      _
    // Predicated region
    $region34: #{net6_forward.1} parent=1 // pred_check
      _
    $region35: #{net6_forward.1} parent=1 // pred_check_branch
      %32 = sbr.rel (0) target = $region37
    $region36: #{net6_forward.1} parent=1 // pred_region
      _
    $region37: #{net6_forward.1} parent=1 // pred_fallthru
      _
    %v34 = vld [vmem:[%s0] sm:$0xf]
    %v35 = vld [vmem:[%s0 + $0x4] sm:$0xf]
    %v36 = vld [vmem:[%s0 + $0x8] sm:$0xf]
    %v37 = vld [vmem:[%s0 + $0xc] sm:$0xf]
    %v38 = vld [vmem:[%s1] sm:$0xf]
    %v39 = vld [vmem:[%s1 + $0x4] sm:$0xf]
    %v40 = vld [vmem:[%s1 + $0x8] sm:$0xf]
    %v41 = vld [vmem:[%s1 + $0xc] sm:$0xf]
    %v42 = vld [vmem:[%s1 + $0x10] sm:$0xf]
    %v43 = vld [vmem:[%s1 + $0x14] sm:$0xf]
    %v44 = vld [vmem:[%s1 + $0x18] sm:$0xf]
    %v45 = vld [vmem:[%s1 + $0x1c] sm:$0xf]
    %v46 = vld [vmem:[%s1 + $0x20] sm:$0xf]
    %v47 = vld [vmem:[%s1 + $0x24] sm:$0xf]
    %v48 = vld [vmem:[%s1 + $0x28] sm:$0xf]
    %v49 = vld [vmem:[%s1 + $0x2c] sm:$0xf]
    %v50 = vld [vmem:[%s1 + $0x30] sm:$0xf]
    %v51 = vld [vmem:[%s1 + $0x34] sm:$0xf]
    %v52 = vld [vmem:[%s1 + $0x38] sm:$0xf]
    %v53 = vld [vmem:[%s1 + $0x3c] sm:$0xf]
    %v54 = vld [vmem:[%s1 + $0x40] sm:$0xf]
    %v55 = vld [vmem:[%s1 + $0x44] sm:$0xf]
    %v56 = vld [vmem:[%s1 + $0x48] sm:$0xf]
    %v57 = vld [vmem:[%s1 + $0x4c] sm:$0xf]
    %v58 = vld [vmem:[%s2] sm:$0xff]
    %v59 = vld [vmem:[%s2 + $0x8] sm:$0xff]
    %v60 = vld [vmem:[%s2 + $0x10] sm:$0xff]
    %v61 = vld [vmem:[%s2 + $0x18] sm:$0xff]
    %v62 = vld [vmem:[%s2 + $0x20] sm:$0xff]
    %v63 = vld [vmem:[%s2 + $0x28] sm:$0xff]
    %v64 = vld [vmem:[%s2 + $0x30] sm:$0xff]
    %v65 = vld [vmem:[%s2 + $0x38] sm:$0xff]
    %v66 = vld [vmem:[%s2 + $0x40] sm:$0xff]
    %v67 = vld [vmem:[%s2 + $0x48] sm:$0xff]
    %v68 = vld [vmem:[%s2 + $0x50] sm:$0xff]
    %v69 = vld [vmem:[%s2 + $0x58] sm:$0xff]
    %v70 = vld [vmem:[%s2 + $0x60] sm:$0xff]
    %v71 = vld [vmem:[%s2 + $0x68] sm:$0xff]
    %v72 = vld [vmem:[%s2 + $0x70] sm:$0xff]
    %v73 = vld [vmem:[%s2 + $0x78] sm:$0xff]
    %v74 = vld [vmem:[%s2 + $0x80] sm:$0xff]
    %v75 = vld [vmem:[%s2 + $0x88] sm:$0xff]
    %v76 = vld [vmem:[%s2 + $0x90] sm:$0xff]
    %v77 = vld [vmem:[%s2 + $0x98] sm:$0xff]
    %79 = vset.pattern.permute.xlu0 0
    %80 = vperm.xlu0 %79, %v58
    %v81 = vpop.permute.xlu0 %80
    %84 = vset.pattern.permute.xlu0 0
    %85 = vperm.xlu0 %84, %v59
    %v86 = vpop.permute.xlu0 %85
    %89 = vset.pattern.permute.xlu0 0
    %90 = vperm.xlu0 %89, %v60
    %v91 = vpop.permute.xlu0 %90
    %94 = vset.pattern.permute.xlu0 0
    %95 = vperm.xlu0 %94, %v61
    %v96 = vpop.permute.xlu0 %95
    %99 = vset.pattern.permute.xlu0 0
    %100 = vperm.xlu0 %99, %v62
    %v101 = vpop.permute.xlu0 %100
    %104 = vset.pattern.permute.xlu0 0
    %105 = vperm.xlu0 %104, %v63
    %v106 = vpop.permute.xlu0 %105
    %109 = vset.pattern.permute.xlu0 0
    %110 = vperm.xlu0 %109, %v64
    %v111 = vpop.permute.xlu0 %110
    %114 = vset.pattern.permute.xlu0 0
    %115 = vperm.xlu0 %114, %v65
    %v116 = vpop.permute.xlu0 %115
    %119 = vset.pattern.permute.xlu0 0
    %120 = vperm.xlu0 %119, %v66
    %v121 = vpop.permute.xlu0 %120
    %124 = vset.pattern.permute.xlu0 0
    %125 = vperm.xlu0 %124, %v67
    %v126 = vpop.permute.xlu0 %125
    %129 = vset.pattern.permute.xlu0 0
    %130 = vperm.xlu0 %129, %v68
    %v131 = vpop.permute.xlu0 %130
    %134 = vset.pattern.permute.xlu0 0
    %135 = vperm.xlu0 %134, %v69
    %v136 = vpop.permute.xlu0 %135
    %139 = vset.pattern.permute.xlu0 0
    %140 = vperm.xlu0 %139, %v70
    %v141 = vpop.permute.xlu0 %140
    %144 = vset.pattern.permute.xlu0 0
    %145 = vperm.xlu0 %144, %v71
    %v146 = vpop.permute.xlu0 %145
    %149 = vset.pattern.permute.xlu0 0
    %150 = vperm.xlu0 %149, %v72
    %v151 = vpop.permute.xlu0 %150
    %154 = vset.pattern.permute.xlu0 0
    %155 = vperm.xlu0 %154, %v73
    %v156 = vpop.permute.xlu0 %155
    %159 = vset.pattern.permute.xlu0 0
    %160 = vperm.xlu0 %159, %v74
    %v161 = vpop.permute.xlu0 %160
    %164 = vset.pattern.permute.xlu0 0
    %165 = vperm.xlu0 %164, %v75
    %v166 = vpop.permute.xlu0 %165
    %169 = vset.pattern.permute.xlu0 0
    %170 = vperm.xlu0 %169, %v76
    %v171 = vpop.permute.xlu0 %170
    %174 = vset.pattern.permute.xlu0 0
    %175 = vperm.xlu0 %174, %v77
    %v176 = vpop.permute.xlu0 %175
    %v198 = vunpack.c.l.b16 %v38
    %v199 = vunpack.c.l.b16 %v39
    %v200 = vunpack.c.l.b16 %v40
    %v201 = vunpack.c.l.b16 %v41
    %v202 = vunpack.c.l.b16 %v42
    %v203 = vunpack.c.l.b16 %v43
    %v204 = vunpack.c.l.b16 %v44
    %v205 = vunpack.c.l.b16 %v45
    %v206 = vunpack.c.l.b16 %v46
    %v207 = vunpack.c.l.b16 %v47
    %v208 = vunpack.c.l.b16 %v48
    %v209 = vunpack.c.l.b16 %v49
    %v210 = vunpack.c.l.b16 %v50
    %v211 = vunpack.c.l.b16 %v51
    %v212 = vunpack.c.l.b16 %v52
    %v213 = vunpack.c.l.b16 %v53
    %v214 = vunpack.c.l.b16 %v54
    %v215 = vunpack.c.l.b16 %v55
    %v216 = vunpack.c.l.b16 %v56
    %v217 = vunpack.c.l.b16 %v57
    %v218 = vpack.c.b16 %v199, %v198
    %v219 = vpack.c.b16 %v201, %v200
    %v220 = vpack.c.b16 %v203, %v202
    %v221 = vpack.c.b16 %v205, %v204
    %v222 = vpack.c.b16 %v207, %v206
    %v223 = vpack.c.b16 %v209, %v208
    %v224 = vpack.c.b16 %v211, %v210
    %v225 = vpack.c.b16 %v213, %v212
    %v226 = vpack.c.b16 %v215, %v214
    %v227 = vpack.c.b16 %v217, %v216
    %v232 = vunpack.c.l.b16 %v34
    %v233 = vunpack.c.l.b16 %v35
    %v234 = vunpack.c.l.b16 %v36
    %v235 = vunpack.c.l.b16 %v37
    %v236 = vpack.c.b16 %v233, %v232
    %v237 = vpack.c.b16 %v235, %v234
    %vm240 = vcmask 261120
    %v242 = vsel %vm240, %v218, 0
    %v245 = vsel %vm240, %v219, 0
    %v248 = vsel %vm240, %v220, 0
    %v251 = vsel %vm240, %v221, 0
    %v254 = vsel %vm240, %v222, 0
    %v257 = vsel %vm240, %v223, 0
    %v260 = vsel %vm240, %v224, 0
    %v263 = vsel %vm240, %v225, 0
    %v266 = vsel %vm240, %v226, 0
    %v269 = vsel %vm240, %v227, 0
    %271 = vmatprep.subr.bf16.mxu0 0
    %272 = vmatpush1.bf16.msra.mxu0 %v236
    %273 = vmatprep.subr.bf16.mxu0 0
    %274 = vmatpush1.bf16.msra.mxu0 %v237
    %275 = vmatprep.subr.bf16.mxu0 0
    %276 = vmatpush1.bf16.msra.mxu0 0
    %277 = vmatprep.subr.bf16.mxu0 0
    %278 = vmatpush1.bf16.msra.mxu0 0
    %279 = vmatprep.subr.bf16.mxu0 0
    %280 = vmatpush1.bf16.msra.mxu0 0
    %281 = vmatprep.subr.bf16.mxu0 0
    %282 = vmatpush1.bf16.msra.mxu0 0
    %283 = vmatprep.subr.bf16.mxu0 0
    %284 = vmatpush1.bf16.msra.mxu0 0
    %285 = vmatprep.subr.bf16.mxu0 0
    %286 = vmatpush1.bf16.msra.mxu0 0
    %287 = vmatprep.subr.bf16.mxu0 0
    %288 = vmatpush1.bf16.msra.mxu0 0
    %289 = vmatprep.subr.bf16.mxu0 0
    %290 = vmatpush1.bf16.msra.mxu0 0
    %291 = vmatprep.subr.bf16.mxu0 0
    %292 = vmatpush1.bf16.msra.mxu0 0
    %293 = vmatprep.subr.bf16.mxu0 0
    %294 = vmatpush1.bf16.msra.mxu0 0
    %295 = vmatprep.subr.bf16.mxu0 0
    %296 = vmatpush1.bf16.msra.mxu0 0
    %297 = vmatprep.subr.bf16.mxu0 0
    %298 = vmatpush1.bf16.msra.mxu0 0
    %299 = vmatprep.subr.bf16.mxu0 0
    %300 = vmatpush1.bf16.msra.mxu0 0
    %301 = vmatprep.subr.bf16.mxu0 0
    %302 = vmatpush1.bf16.msra.mxu0 0
    %303 = vmatprep.mubr.bf16.mxu0 0
    %304 = vmatmul.mubr.bf16.gmra.mrb[0].mxu0 %v242
    %v305 = vpop.f32.mrb[0].mxu0
    %v306 = vadd.f32 %v81, %v305
    %v307 = vpop.f32.mrb[0].mxu0
    %v308 = vpop.f32.mrb[0].mxu0
    %v309 = vadd.f32 %v86, %v308
    %v310 = vpop.f32.mrb[0].mxu0
    %311 = vmatprep.mubr.bf16.mxu0 0
    %312 = vmatmul.mubr.bf16.gmra.mrb[0].mxu0 %v245
    %v313 = vpop.f32.mrb[0].mxu0
    %v314 = vadd.f32 %v91, %v313
    %v315 = vpop.f32.mrb[0].mxu0
    %v316 = vpop.f32.mrb[0].mxu0
    %v317 = vadd.f32 %v96, %v316
    %v318 = vpop.f32.mrb[0].mxu0
    %319 = vmatprep.mubr.bf16.mxu0 0
    %320 = vmatmul.mubr.bf16.gmra.mrb[0].mxu0 %v248
    %v321 = vpop.f32.mrb[0].mxu0
    %v322 = vadd.f32 %v101, %v321
    %v323 = vpop.f32.mrb[0].mxu0
    %v324 = vpop.f32.mrb[0].mxu0
    %v325 = vadd.f32 %v106, %v324
    %v326 = vpop.f32.mrb[0].mxu0
    %327 = vmatprep.mubr.bf16.mxu0 0
    %328 = vmatmul.mubr.bf16.gmra.mrb[0].mxu0 %v251
    %v329 = vpop.f32.mrb[0].mxu0
    %v330 = vadd.f32 %v111, %v329
    %v331 = vpop.f32.mrb[0].mxu0
    %v332 = vpop.f32.mrb[0].mxu0
    %v333 = vadd.f32 %v116, %v332
    %v334 = vpop.f32.mrb[0].mxu0
    %335 = vmatprep.mubr.bf16.mxu0 0
    %336 = vmatmul.mubr.bf16.gmra.mrb[0].mxu0 %v254
    %v337 = vpop.f32.mrb[0].mxu0
    %v338 = vadd.f32 %v121, %v337
    %v339 = vpop.f32.mrb[0].mxu0
    %v340 = vpop.f32.mrb[0].mxu0
    %v341 = vadd.f32 %v126, %v340
    %v342 = vpop.f32.mrb[0].mxu0
    %343 = vmatprep.mubr.bf16.mxu0 0
    %344 = vmatmul.mubr.bf16.gmra.mrb[0].mxu0 %v257
    %v345 = vpop.f32.mrb[0].mxu0
    %v346 = vadd.f32 %v131, %v345
    %v347 = vpop.f32.mrb[0].mxu0
    %v348 = vpop.f32.mrb[0].mxu0
    %v349 = vadd.f32 %v136, %v348
    %v350 = vpop.f32.mrb[0].mxu0
    %351 = vmatprep.mubr.bf16.mxu0 0
    %352 = vmatmul.mubr.bf16.gmra.mrb[0].mxu0 %v260
    %v353 = vpop.f32.mrb[0].mxu0
    %v354 = vadd.f32 %v141, %v353
    %v355 = vpop.f32.mrb[0].mxu0
    %v356 = vpop.f32.mrb[0].mxu0
    %v357 = vadd.f32 %v146, %v356
    %v358 = vpop.f32.mrb[0].mxu0
    %359 = vmatprep.mubr.bf16.mxu0 0
    %360 = vmatmul.mubr.bf16.gmra.mrb[0].mxu0 %v263
    %v361 = vpop.f32.mrb[0].mxu0
    %v362 = vadd.f32 %v151, %v361
    %v363 = vpop.f32.mrb[0].mxu0
    %v364 = vpop.f32.mrb[0].mxu0
    %v365 = vadd.f32 %v156, %v364
    %v366 = vpop.f32.mrb[0].mxu0
    %367 = vmatprep.mubr.bf16.mxu0 0
    %368 = vmatmul.mubr.bf16.gmra.mrb[0].mxu0 %v266
    %v369 = vpop.f32.mrb[0].mxu0
    %v370 = vadd.f32 %v161, %v369
    %v371 = vpop.f32.mrb[0].mxu0
    %v372 = vpop.f32.mrb[0].mxu0
    %v373 = vadd.f32 %v166, %v372
    %v374 = vpop.f32.mrb[0].mxu0
    %375 = vmatprep.mubr.bf16.mxu0 0
    %376 = vmatmul.mubr.bf16.gmra.mrb[0].mxu0 %v269
    %v377 = vpop.f32.mrb[0].mxu0
    %v378 = vadd.f32 %v171, %v377
    %v379 = vpop.f32.mrb[0].mxu0
    %v380 = vpop.f32.mrb[0].mxu0
    %v381 = vadd.f32 %v176, %v380
    %v382 = vpop.f32.mrb[0].mxu0
    %383 = vdwg.mxu0
    %v384 = vmax.f32 %v306, 0.0
    %v385 = vmax.f32 %v309, 0.0
    %v386 = vmax.f32 %v314, 0.0
    %v387 = vmax.f32 %v317, 0.0
    %v388 = vmax.f32 %v322, 0.0
    %v389 = vmax.f32 %v325, 0.0
    %v390 = vmax.f32 %v330, 0.0
    %v391 = vmax.f32 %v333, 0.0
    %v392 = vmax.f32 %v338, 0.0
    %v393 = vmax.f32 %v341, 0.0
    %v394 = vmax.f32 %v346, 0.0
    %v395 = vmax.f32 %v349, 0.0
    %v396 = vmax.f32 %v354, 0.0
    %v397 = vmax.f32 %v357, 0.0
    %v398 = vmax.f32 %v362, 0.0
    %v399 = vmax.f32 %v365, 0.0
    %v400 = vmax.f32 %v370, 0.0
    %v401 = vmax.f32 %v373, 0.0
    %v402 = vmax.f32 %v378, 0.0
    %v403 = vmax.f32 %v381, 0.0
    %v404 = vld [vmem:[%s3] sm:$0xff]
    %v405 = vld [vmem:[%s3 + $0x8] sm:$0xff]
    %v406 = vld [vmem:[%s3 + $0x10] sm:$0xff]
    %v407 = vld [vmem:[%s3 + $0x18] sm:$0xff]
    %v408 = vld [vmem:[%s3 + $0x20] sm:$0xff]
    %v409 = vld [vmem:[%s3 + $0x28] sm:$0xff]
    %v410 = vld [vmem:[%s3 + $0x30] sm:$0xff]
    %v411 = vld [vmem:[%s3 + $0x38] sm:$0xff]
    %v412 = vld [vmem:[%s3 + $0x40] sm:$0xff]
    %v413 = vld [vmem:[%s3 + $0x48] sm:$0xff]
    %v414 = vld [vmem:[%s3 + $0x50] sm:$0xff]
    %v415 = vld [vmem:[%s3 + $0x58] sm:$0xff]
    %v416 = vld [vmem:[%s3 + $0x60] sm:$0x33]
    %v417 = vpack.c.bf16 %v385, %v384
    %v418 = vpack.c.bf16 %v387, %v386
    %v419 = vpack.c.bf16 %v389, %v388
    %v420 = vpack.c.bf16 %v391, %v390
    %v421 = vpack.c.bf16 %v393, %v392
    %v422 = vpack.c.bf16 %v395, %v394
    %v423 = vpack.c.bf16 %v397, %v396
    %v424 = vpack.c.bf16 %v399, %v398
    %v425 = vpack.c.bf16 %v401, %v400
    %v426 = vpack.c.bf16 %v403, %v402
    %v427 = vld [vmem:[%s4] sm:$0xff]
    %v428 = vld [vmem:[%s4 + $0x8] sm:$0xff]
    %v429 = vld [vmem:[%s4 + $0x10] sm:$0xff]
    %v430 = vld [vmem:[%s4 + $0x18] sm:$0xff]
    %v431 = vld [vmem:[%s4 + $0x20] sm:$0xff]
    %v432 = vld [vmem:[%s4 + $0x28] sm:$0xff]
    %v433 = vld [vmem:[%s4 + $0x30] sm:$0xff]
    %v434 = vld [vmem:[%s4 + $0x38] sm:$0xff]
    %v435 = vld [vmem:[%s4 + $0x40] sm:$0xff]
    %v436 = vld [vmem:[%s4 + $0x48] sm:$0xff]
    %v437 = vld [vmem:[%s4 + $0x50] sm:$0xff]
    %v438 = vld [vmem:[%s4 + $0x58] sm:$0xff]
    %v439 = vld [vmem:[%s4 + $0x60] sm:$0xf]
    %441 = vset.pattern.permute.xlu0 0
    %442 = vperm.xlu0 %441, %v427
    %v443 = vpop.permute.xlu0 %442
    %446 = vset.pattern.permute.xlu0 0
    %447 = vperm.xlu0 %446, %v428
    %v448 = vpop.permute.xlu0 %447
    %451 = vset.pattern.permute.xlu0 0
    %452 = vperm.xlu0 %451, %v429
    %v453 = vpop.permute.xlu0 %452
    %456 = vset.pattern.permute.xlu0 0
    %457 = vperm.xlu0 %456, %v430
    %v458 = vpop.permute.xlu0 %457
    %461 = vset.pattern.permute.xlu0 0
    %462 = vperm.xlu0 %461, %v431
    %v463 = vpop.permute.xlu0 %462
    %466 = vset.pattern.permute.xlu0 0
    %467 = vperm.xlu0 %466, %v432
    %v468 = vpop.permute.xlu0 %467
    %471 = vset.pattern.permute.xlu0 0
    %472 = vperm.xlu0 %471, %v433
    %v473 = vpop.permute.xlu0 %472
    %476 = vset.pattern.permute.xlu0 0
    %477 = vperm.xlu0 %476, %v434
    %v478 = vpop.permute.xlu0 %477
    %481 = vset.pattern.permute.xlu0 0
    %482 = vperm.xlu0 %481, %v435
    %v483 = vpop.permute.xlu0 %482
    %486 = vset.pattern.permute.xlu0 0
    %487 = vperm.xlu0 %486, %v436
    %v488 = vpop.permute.xlu0 %487
    %491 = vset.pattern.permute.xlu0 0
    %492 = vperm.xlu0 %491, %v437
    %v493 = vpop.permute.xlu0 %492
    %496 = vset.pattern.permute.xlu0 0
    %497 = vperm.xlu0 %496, %v438
    %v498 = vpop.permute.xlu0 %497
    %501 = vset.pattern.permute.xlu0 0
    %502 = vperm.xlu0 %501, %v439
    %v503 = vpop.permute.xlu0 %502
    %v518 = vunpack.c.l.b16 %v404
    %v519 = vunpack.c.h.b16 %v404
    %v520 = vunpack.c.l.b16 %v405
    %v521 = vunpack.c.h.b16 %v405
    %v522 = vunpack.c.l.b16 %v406
    %v523 = vunpack.c.h.b16 %v406
    %v524 = vunpack.c.l.b16 %v407
    %v525 = vunpack.c.h.b16 %v407
    %v526 = vunpack.c.l.b16 %v408
    %v527 = vunpack.c.h.b16 %v408
    %v528 = vunpack.c.l.b16 %v409
    %v529 = vunpack.c.h.b16 %v409
    %v530 = vunpack.c.l.b16 %v410
    %v531 = vunpack.c.h.b16 %v410
    %v532 = vunpack.c.l.b16 %v411
    %v533 = vunpack.c.h.b16 %v411
    %v534 = vunpack.c.l.b16 %v412
    %v535 = vunpack.c.h.b16 %v412
    %v536 = vunpack.c.l.b16 %v413
    %v537 = vunpack.c.h.b16 %v413
    %v538 = vunpack.c.l.b16 %v414
    %v539 = vunpack.c.h.b16 %v414
    %v540 = vunpack.c.l.b16 %v415
    %v541 = vunpack.c.h.b16 %v415
    %v542 = vunpack.c.l.b16 %v416
    %v543 = vunpack.c.h.b16 %v416
    %v544 = vpack.c.b16 %v520, %v518
    %v545 = vpack.c.b16 %v521, %v519
    %v546 = vpack.c.b16 %v524, %v522
    %v547 = vpack.c.b16 %v525, %v523
    %v548 = vpack.c.b16 %v528, %v526
    %v549 = vpack.c.b16 %v529, %v527
    %v550 = vpack.c.b16 %v532, %v530
    %v551 = vpack.c.b16 %v533, %v531
    %v552 = vpack.c.b16 %v536, %v534
    %v553 = vpack.c.b16 %v537, %v535
    %v554 = vpack.c.b16 %v540, %v538
    %v555 = vpack.c.b16 %v541, %v539
    %v556 = vpack.c.b16 %v542, %v542
    %v557 = vpack.c.b16 %v543, %v543
    %v566 = vsel %vm240, %v545, 0
    %v569 = vsel %vm240, %v547, 0
    %v572 = vsel %vm240, %v549, 0
    %v575 = vsel %vm240, %v551, 0
    %v578 = vsel %vm240, %v553, 0
    %v581 = vsel %vm240, %v555, 0
    %v584 = vsel %vm240, %v557, 0
    %586 = vmatprep.subr.bf16.mxu0 0
    %587 = vmatpush1.bf16.msra.mxu0 %v417
    %588 = vmatprep.subr.bf16.mxu0 0
    %589 = vmatpush1.bf16.msra.mxu0 %v418
    %590 = vmatprep.subr.bf16.mxu0 0
    %591 = vmatpush1.bf16.msra.mxu0 %v419
    %592 = vmatprep.subr.bf16.mxu0 0
    %593 = vmatpush1.bf16.msra.mxu0 %v420
    %594 = vmatprep.subr.bf16.mxu0 0
    %595 = vmatpush1.bf16.msra.mxu0 %v421
    %596 = vmatprep.subr.bf16.mxu0 0
    %597 = vmatpush1.bf16.msra.mxu0 %v422
    %598 = vmatprep.subr.bf16.mxu0 0
    %599 = vmatpush1.bf16.msra.mxu0 %v423
    %600 = vmatprep.subr.bf16.mxu0 0
    %601 = vmatpush1.bf16.msra.mxu0 %v424
    %602 = vmatprep.subr.bf16.mxu0 0
    %603 = vmatpush1.bf16.msra.mxu0 %v425
    %604 = vmatprep.subr.bf16.mxu0 0
    %605 = vmatpush1.bf16.msra.mxu0 %v426
    %606 = vmatprep.subr.bf16.mxu0 0
    %607 = vmatpush1.bf16.msra.mxu0 0
    %608 = vmatprep.subr.bf16.mxu0 0
    %609 = vmatpush1.bf16.msra.mxu0 0
    %610 = vmatprep.subr.bf16.mxu0 0
    %611 = vmatpush1.bf16.msra.mxu0 0
    %612 = vmatprep.subr.bf16.mxu0 0
    %613 = vmatpush1.bf16.msra.mxu0 0
    %614 = vmatprep.subr.bf16.mxu0 0
    %615 = vmatpush1.bf16.msra.mxu0 0
    %616 = vmatprep.subr.bf16.mxu0 0
    %617 = vmatpush1.bf16.msra.mxu0 0
    %618 = vmatprep.mubr.bf16.mxu0 %v566
    %619 = vmatmul.mubr.bf16.gmra.mrb[0].mxu0 %v544
    %v620 = vpop.f32.mrb[0].mxu0
    %v621 = vadd.f32 %v443, %v620
    %v622 = vpop.f32.mrb[0].mxu0
    %v623 = vpop.f32.mrb[0].mxu0
    %v624 = vadd.f32 %v448, %v623
    %v625 = vpop.f32.mrb[0].mxu0
    %626 = vmatprep.mubr.bf16.mxu0 %v569
    %627 = vmatmul.mubr.bf16.gmra.mrb[0].mxu0 %v546
    %v628 = vpop.f32.mrb[0].mxu0
    %v629 = vadd.f32 %v453, %v628
    %v630 = vpop.f32.mrb[0].mxu0
    %v631 = vpop.f32.mrb[0].mxu0
    %v632 = vadd.f32 %v458, %v631
    %v633 = vpop.f32.mrb[0].mxu0
    %634 = vmatprep.mubr.bf16.mxu0 %v572
    %635 = vmatmul.mubr.bf16.gmra.mrb[0].mxu0 %v548
    %v636 = vpop.f32.mrb[0].mxu0
    %v637 = vadd.f32 %v463, %v636
    %v638 = vpop.f32.mrb[0].mxu0
    %v639 = vpop.f32.mrb[0].mxu0
    %v640 = vadd.f32 %v468, %v639
    %v641 = vpop.f32.mrb[0].mxu0
    %642 = vmatprep.mubr.bf16.mxu0 %v575
    %643 = vmatmul.mubr.bf16.gmra.mrb[0].mxu0 %v550
    %v644 = vpop.f32.mrb[0].mxu0
    %v645 = vadd.f32 %v473, %v644
    %v646 = vpop.f32.mrb[0].mxu0
    %v647 = vpop.f32.mrb[0].mxu0
    %v648 = vadd.f32 %v478, %v647
    %v649 = vpop.f32.mrb[0].mxu0
    %650 = vmatprep.mubr.bf16.mxu0 %v578
    %651 = vmatmul.mubr.bf16.gmra.mrb[0].mxu0 %v552
    %v652 = vpop.f32.mrb[0].mxu0
    %v653 = vadd.f32 %v483, %v652
    %v654 = vpop.f32.mrb[0].mxu0
    %v655 = vpop.f32.mrb[0].mxu0
    %v656 = vadd.f32 %v488, %v655
    %v657 = vpop.f32.mrb[0].mxu0
    %658 = vmatprep.mubr.bf16.mxu0 %v581
    %659 = vmatmul.mubr.bf16.gmra.mrb[0].mxu0 %v554
    %v660 = vpop.f32.mrb[0].mxu0
    %v661 = vadd.f32 %v493, %v660
    %v662 = vpop.f32.mrb[0].mxu0
    %v663 = vpop.f32.mrb[0].mxu0
    %v664 = vadd.f32 %v498, %v663
    %v665 = vpop.f32.mrb[0].mxu0
    %666 = vmatprep.mubr.bf16.mxu0 %v584
    %667 = vmatmul.mubr.bf16.gmra.mrb[0].mxu0 %v556
    %v668 = vpop.f32.mrb[0].mxu0
    %v669 = vadd.f32 %v503, %v668
    %v670 = vpop.f32.mrb[0].mxu0
    %v671 = vpop.f32.mrb[0].mxu0
    %v672 = vpop.f32.mrb[0].mxu0
    %673 = vdwg.mxu0
    %v674 = vmax.f32 %v621, 0.0
    %v675 = vmax.f32 %v624, 0.0
    %v676 = vmax.f32 %v629, 0.0
    %v677 = vmax.f32 %v632, 0.0
    %v678 = vmax.f32 %v637, 0.0
    %v679 = vmax.f32 %v640, 0.0
    %v680 = vmax.f32 %v645, 0.0
    %v681 = vmax.f32 %v648, 0.0
    %v682 = vmax.f32 %v653, 0.0
    %v683 = vmax.f32 %v656, 0.0
    %v684 = vmax.f32 %v661, 0.0
    %v685 = vmax.f32 %v664, 0.0
    %v686 = vmax.f32 %v669, 0.0
    %v687 = vld [vmem:[%s5] sm:$0xf]
    %v688 = vld [vmem:[%s5 + $0x4] sm:$0xf]
    %v689 = vld [vmem:[%s5 + $0x8] sm:$0x3]
    %v690 = vpack.c.bf16 %v675, %v674
    %v691 = vpack.c.bf16 %v677, %v676
    %v692 = vpack.c.bf16 %v679, %v678
    %v693 = vpack.c.bf16 %v681, %v680
    %v694 = vpack.c.bf16 %v683, %v682
    %v695 = vpack.c.bf16 %v685, %v684
    %v696 = vpack.c.bf16 %v686, %v686
    %v697 = vld [vmem:[%s6] sm:$0xff]
    %v698 = vld [vmem:[%s6 + $0x8] sm:$0xff]
    %v699 = vld [vmem:[%s6 + $0x10] sm:$0xf]
    %701 = vset.pattern.permute.xlu0 0
    %702 = vperm.xlu0 %701, %v697
    %v703 = vpop.permute.xlu0 %702
    %706 = vset.pattern.permute.xlu0 0
    %707 = vperm.xlu0 %706, %v698
    %v708 = vpop.permute.xlu0 %707
    %711 = vset.pattern.permute.xlu0 0
    %712 = vperm.xlu0 %711, %v699
    %v713 = vpop.permute.xlu0 %712
    %v718 = vunpack.c.l.b16 %v687
    %v719 = vunpack.c.l.b16 %v688
    %v720 = vunpack.c.l.b16 %v689
    %v721 = vpack.c.b16 %v719, %v718
    %v722 = vpack.c.b16 %v720, %v720
    %vm723 = vcmask 818176
    %v725 = vsel %vm723, %v721, 0
    %v728 = vsel %vm723, %v722, 0
    %vm730 = vcmask 1041408
    %v732 = vsel %vm730, %v696, 0
    %734 = vmatprep.subr.bf16.mxu0 0
    %735 = vmatpush1.bf16.msra.mxu0 %v690
    %736 = vmatprep.subr.bf16.mxu0 0
    %737 = vmatpush1.bf16.msra.mxu0 %v691
    %738 = vmatprep.subr.bf16.mxu0 0
    %739 = vmatpush1.bf16.msra.mxu0 %v692
    %740 = vmatprep.subr.bf16.mxu0 0
    %741 = vmatpush1.bf16.msra.mxu0 %v693
    %742 = vmatprep.subr.bf16.mxu0 0
    %743 = vmatpush1.bf16.msra.mxu0 %v694
    %744 = vmatprep.subr.bf16.mxu0 0
    %745 = vmatpush1.bf16.msra.mxu0 %v695
    %746 = vmatprep.subr.bf16.mxu0 0
    %747 = vmatpush1.bf16.msra.mxu0 %v732
    %748 = vmatprep.subr.bf16.mxu0 0
    %749 = vmatpush1.bf16.msra.mxu0 0
    %750 = vmatprep.subr.bf16.mxu0 0
    %751 = vmatpush1.bf16.msra.mxu0 0
    %752 = vmatprep.subr.bf16.mxu0 0
    %753 = vmatpush1.bf16.msra.mxu0 0
    %754 = vmatprep.subr.bf16.mxu0 0
    %755 = vmatpush1.bf16.msra.mxu0 0
    %756 = vmatprep.subr.bf16.mxu0 0
    %757 = vmatpush1.bf16.msra.mxu0 0
    %758 = vmatprep.subr.bf16.mxu0 0
    %759 = vmatpush1.bf16.msra.mxu0 0
    %760 = vmatprep.subr.bf16.mxu0 0
    %761 = vmatpush1.bf16.msra.mxu0 0
    %762 = vmatprep.subr.bf16.mxu0 0
    %763 = vmatpush1.bf16.msra.mxu0 0
    %764 = vmatprep.subr.bf16.mxu0 0
    %765 = vmatpush1.bf16.msra.mxu0 0
    %766 = vmatprep.mubr.bf16.mxu0 0
    %767 = vmatmul.mubr.bf16.gmra.mrb[0].mxu0 %v725
    %v768 = vpop.f32.mrb[0].mxu0
    %v769 = vadd.f32 %v703, %v768
    %v770 = vpop.f32.mrb[0].mxu0
    %v771 = vpop.f32.mrb[0].mxu0
    %v772 = vadd.f32 %v708, %v771
    %v773 = vpop.f32.mrb[0].mxu0
    %774 = vmatprep.mubr.bf16.mxu0 0
    %775 = vmatmul.mubr.bf16.gmra.mrb[0].mxu0 %v728
    %v776 = vpop.f32.mrb[0].mxu0
    %v777 = vadd.f32 %v713, %v776
    %v778 = vpop.f32.mrb[0].mxu0
    %v779 = vpop.f32.mrb[0].mxu0
    %v780 = vpop.f32.mrb[0].mxu0
    %781 = vdwg.mxu0
    %v782 = vmax.f32 %v769, 0.0
    %v783 = vmax.f32 %v772, 0.0
    %v784 = vmax.f32 %v777, 0.0
    %v785 = vld [vmem:[%s7] sm:$0x3]
    %v786 = vpack.c.bf16 %v783, %v782
    %v787 = vpack.c.bf16 %v784, %v784
    %v788 = vld [vmem:[%s8] sm:$0xf]
    %790 = vset.pattern.permute.xlu0 0
    %791 = vperm.xlu0 %790, %v788
    %v792 = vpop.permute.xlu0 %791
    %vm794 = vcmask 162816
    %v796 = vsel %vm794, %v785, 0
    %v799 = vsel %vm730, %v787, 0
    %801 = vmatprep.subr.bf16.mxu0 0
    %802 = vmatpush1.bf16.msra.mxu0 %v786
    %803 = vmatprep.subr.bf16.mxu0 0
    %804 = vmatpush1.bf16.msra.mxu0 %v799
    %805 = vmatprep.subr.bf16.mxu0 0
    %806 = vmatpush1.bf16.msra.mxu0 0
    %807 = vmatprep.subr.bf16.mxu0 0
    %808 = vmatpush1.bf16.msra.mxu0 0
    %809 = vmatprep.subr.bf16.mxu0 0
    %810 = vmatpush1.bf16.msra.mxu0 0
    %811 = vmatprep.subr.bf16.mxu0 0
    %812 = vmatpush1.bf16.msra.mxu0 0
    %813 = vmatprep.subr.bf16.mxu0 0
    %814 = vmatpush1.bf16.msra.mxu0 0
    %815 = vmatprep.subr.bf16.mxu0 0
    %816 = vmatpush1.bf16.msra.mxu0 0
    %817 = vmatprep.subr.bf16.mxu0 0
    %818 = vmatpush1.bf16.msra.mxu0 0
    %819 = vmatprep.subr.bf16.mxu0 0
    %820 = vmatpush1.bf16.msra.mxu0 0
    %821 = vmatprep.subr.bf16.mxu0 0
    %822 = vmatpush1.bf16.msra.mxu0 0
    %823 = vmatprep.subr.bf16.mxu0 0
    %824 = vmatpush1.bf16.msra.mxu0 0
    %825 = vmatprep.subr.bf16.mxu0 0
    %826 = vmatpush1.bf16.msra.mxu0 0
    %827 = vmatprep.subr.bf16.mxu0 0
    %828 = vmatpush1.bf16.msra.mxu0 0
    %829 = vmatprep.subr.bf16.mxu0 0
    %830 = vmatpush1.bf16.msra.mxu0 0
    %831 = vmatprep.subr.bf16.mxu0 0
    %832 = vmatpush1.bf16.msra.mxu0 0
    %833 = vmatprep.mubr.bf16.mxu0 0
    %834 = vmatmul.mubr.bf16.gmra.mrb[0].mxu0 %v796
    %v835 = vpop.f32.mrb[0].mxu0
    %v836 = vadd.f32 %v792, %v835
    %v837 = vpop.f32.mrb[0].mxu0
    %v838 = vpop.f32.mrb[0].mxu0
    %v839 = vpop.f32.mrb[0].mxu0
    %840 = vdwg.mxu0
    %vm841 = vcmask 60416
    %842 = vst.msk [vmem:[#allocation2] sm:$0xf] %vm841, %v836
    // Predicated region
    $region38: #{net6_forward.1} parent=1 // pred_check
      _
    $region39: #{net6_forward.1} parent=1 // pred_check_branch
      %844 = sbr.rel (0) target = $region41
    $region40: #{net6_forward.1} parent=1 // pred_region
      %s846 = ssub.s32 64, 64
      %847 = vsyncadd [#allocation3], %s846
      %s849 = sshll.u32 [#allocation2], 4
      %s850 = int_to_ptr.vmem [resolvable:$true] %s849
      %852 = dma.vmem_to_hbm [thread:$0]  %s850, 64, %s9, [#allocation3]
    $region41: #{net6_forward.1} parent=1 // pred_fallthru
      _
    // Predicated region
    $region42: #{net6_forward.1} parent=1 // pred_check
      _
    $region43: #{net6_forward.1} parent=1 // pred_check_branch
      %854 = sbr.rel (0) target = $region45
    $region44: #{net6_forward.1} parent=1 // pred_region
      %855 = dma.done [#allocation3], 64
    $region45: #{net6_forward.1} parent=1 // pred_fallthru
      _
    %856 = vsyncpa [#allocation3], 1

</llo_original>
